<compile_context>
chip_gen: v6e
topology: v6e:2x2x1
jax: 0.10.0
libtpu: 0.0.40
codegen_flags: <defaults>
</compile_context>

<pallas_src>
import math

import jax
import jax.numpy as jnp
from jax.experimental import pallas as pl
from jax.experimental.pallas import tpu as pltpu


def shallow_nn_forward(x, params, *, batch_tile=None):
    """Fused ShallowNN forward. x: (B, feats). params: dict from init_params."""
    B, F = x.shape

    if batch_tile is None:
        # ~8 MiB of x per grid step (16 MiB double-buffered).
        batch_tile = max(8, min(131072, (8 * 1024 * 1024) // (F * x.dtype.itemsize)))
    tb = max(8, (int(batch_tile) // 8) * 8)
    if tb >= B:
        tb = B                      # single resident tile: x read from HBM once
    n_tiles = pl.cdiv(B, tb)
    has_tail = (B % tb) != 0        # ragged last block -> mask in phase 0

    w1 = params["w1"].astype(x.dtype)            # (F, 32); match x dtype for MXU
    gamma, beta = params["gamma"], params["beta"]
    w2, b2 = params["w2"], params["b2"]
    w3_row = params["w3"].reshape(1, 16)          # (16,1) -> lane-dense (1,16)
    b3 = params["b3"]

    inv_b = 1.0 / float(B)
    n0 = float(min(B, tb))                        # rows in the first tile (all valid)

    def kernel(x_ref, w1_ref, gamma_ref, beta_ref, w2_ref, b2_ref,
               w3_ref, b3_ref, o_ref,
               sum_sc, sumsq_sc, c_sc, scale_sc, shift_sc):
        phase = pl.program_id(0)
        i = pl.program_id(1)

        # layer_1 (bias dropped: exactly cancelled by the BN mean subtraction)
        h1 = jnp.dot(x_ref[...], w1_ref[...], preferred_element_type=jnp.float32)

        if has_tail:
            row = i * tb + jax.lax.broadcasted_iota(jnp.int32, (tb, 1), 0)
            valid = row < B
            h1m = jnp.where(valid, h1, 0.0)
        else:
            valid = None
            h1m = h1

        # ---------------- phase 0: BN statistics (shifted accumulation) -------
        @pl.when((phase == 0) & (i == 0))
        def _init():
            sum_sc[...] = jnp.zeros_like(sum_sc)
            sumsq_sc[...] = jnp.zeros_like(sumsq_sc)
            # first-tile column mean as the shift: de-cancels E[x^2] - E[x]^2
            c_sc[...] = jnp.sum(h1m, axis=0, keepdims=True) * (1.0 / n0)

        @pl.when(phase == 0)
        def _stats():
            d = h1 - c_sc[...]
            if has_tail:
                d = jnp.where(valid, d, 0.0)
            sum_sc[...] += jnp.sum(d, axis=0, keepdims=True)
            sumsq_sc[...] += jnp.sum(d * d, axis=0, keepdims=True)

        # -------- phase boundary: fold BN (batch stats) + affine into FMA -----
        @pl.when((phase == 1) & (i == 0))
        def _fold():
            mean_d = sum_sc[...] * inv_b
            var = jnp.maximum(sumsq_sc[...] * inv_b - mean_d * mean_d, 0.0)
            scale = gamma_ref[...] * jax.lax.rsqrt(var + 1e-5)
            scale_sc[...] = scale
            shift_sc[...] = beta_ref[...] - (mean_d + c_sc[...]) * scale

        # ---------------- phase 1: bn + relu + layer_2 + relu + layer_3 -------
        @pl.when(phase == 1)
        def _apply():
            a1 = jnp.maximum(h1 * scale_sc[...] + shift_sc[...], 0.0)
            a2 = jnp.maximum(
                jnp.dot(a1, w2_ref[...], preferred_element_type=jnp.float32)
                + b2_ref[...], 0.0)
            # layer_3 (16 -> 1) on the VPU/XLU: avoids a 1-output-lane MXU op.
            o_ref[...] = (jnp.sum(a2 * w3_ref[...], axis=-1, keepdims=True)
                          + b3_ref[...]).astype(o_ref.dtype)

    def const(a):  # parameter block: constant index_map -> VMEM-resident
        return pl.BlockSpec(a.shape, lambda p, i: (0, 0))

    out = pl.pallas_call(
        kernel,
        out_shape=jax.ShapeDtypeStruct((B, 1), jnp.float32),
        grid_spec=pltpu.PrefetchScalarGridSpec(
            num_scalar_prefetch=0,
            grid=(2, n_tiles),
            in_specs=[pl.BlockSpec((tb, F), lambda p, i: (i, 0)),
                      const(w1), const(gamma), const(beta),
                      const(w2), const(b2), const(w3_row), const(b3)],
            # output block index frozen at 0 during phase 0 -> no output
            # writeback DMA until phase 1 actually produces each tile.
            out_specs=pl.BlockSpec((tb, 1), lambda p, i: (i * p, 0)),
            scratch_shapes=[pltpu.VMEM((1, 32), jnp.float32)] * 5,
        ),
        compiler_params=pltpu.CompilerParams(
            dimension_semantics=("arbitrary", "arbitrary")),
    )(x, w1, gamma, beta, w2, b2, w3_row, b3)

    return out


# ------------------------------- params / reference -------------------------
def _kaiming_uniform(key, fan_in, fan_out):
    # PyTorch kaiming_uniform_(mode='fan_in', nonlinearity='relu'):
    # bound = sqrt(2) * sqrt(3 / fan_in) = sqrt(6 / fan_in). Stored (in, out).
    bound = math.sqrt(6.0 / fan_in)
    return jax.random.uniform(key, (fan_in, fan_out), jnp.float32, -bound, bound)


def init_params(key, feats):
    k1, k2, k3 = jax.random.split(key, 3)
    return {
        "w1": _kaiming_uniform(k1, feats, 32),
        "b1": jnp.zeros((1, 32), jnp.float32),   # kept for fidelity; cancelled by BN
        "gamma": jnp.ones((1, 32), jnp.float32),
        "beta": jnp.zeros((1, 32), jnp.float32),
        "w2": _kaiming_uniform(k2, 32, 16),
        "b2": jnp.zeros((1, 16), jnp.float32),
        "w3": _kaiming_uniform(k3, 16, 1),
        "b3": jnp.zeros((1, 1), jnp.float32),
    }


def reference_forward(x, params):
    h1 = x @ params["w1"] + params["b1"]
    mean = jnp.mean(h1, axis=0, keepdims=True)
    var = jnp.mean((h1 - mean) ** 2, axis=0, keepdims=True)
    h1 = (h1 - mean) * jax.lax.rsqrt(var + 1e-5) * params["gamma"] + params["beta"]
    a1 = jnp.maximum(h1, 0.0)
    a2 = jnp.maximum(a1 @ params["w2"] + params["b2"], 0.0)
    return a2 @ params["w3"] + params["b3"]


if __name__ == "__main__":
    key = jax.random.PRNGKey(0)
    k_x, k_p, k_x2 = jax.random.split(key, 3)

    B, FEATS = 8, 16
    params = init_params(k_p, FEATS)

    # Single resident tile (n_tiles == 1): x read from HBM exactly once.
    x = jax.random.normal(k_x, (B, FEATS), jnp.float32)
    out = jax.block_until_ready(shallow_nn_forward(x, params))
    ref = reference_forward(x, params)
    assert out.shape == (B, 1)
    assert jnp.allclose(out, ref, atol=1e-4, rtol=1e-4), "mismatch (single tile)"

    # Multi-tile + ragged tail (exercises the two-phase grid, tail masking, and
    # partial output-block writeback with no zero-pad copy).
    B2 = 200
    x2 = jax.random.normal(k_x2, (B2, FEATS), jnp.float32)
    out2 = jax.block_until_ready(shallow_nn_forward(x2, params, batch_tile=64))
    ref2 = reference_forward(x2, params)
    assert out2.shape == (B2, 1)
    assert jnp.allclose(out2, ref2, atol=1e-4, rtol=1e-4), "mismatch (multi tile)"

    print("KERNEL_OK")
</pallas_src>

<mosaic_0001>
module attributes {stable_mosaic.version = 11 : i64} {
  func.func @kernel(%arg0: i32, %arg1: i32, %arg2: memref<8x16xf32, #tpu.memory_space<vmem>>, %arg3: memref<16x32xf32, #tpu.memory_space<vmem>>, %arg4: memref<1x32xf32, #tpu.memory_space<vmem>>, %arg5: memref<1x32xf32, #tpu.memory_space<vmem>>, %arg6: memref<32x16xf32, #tpu.memory_space<vmem>>, %arg7: memref<1x16xf32, #tpu.memory_space<vmem>>, %arg8: memref<1x16xf32, #tpu.memory_space<vmem>>, %arg9: memref<1x1xf32, #tpu.memory_space<vmem>>, %arg10: memref<8x1xf32, #tpu.memory_space<vmem>>, %arg11: memref<1x32xf32, #tpu.memory_space<vmem>>, %arg12: memref<1x32xf32, #tpu.memory_space<vmem>>, %arg13: memref<1x32xf32, #tpu.memory_space<vmem>>, %arg14: memref<1x32xf32, #tpu.memory_space<vmem>>, %arg15: memref<1x32xf32, #tpu.memory_space<vmem>>) attributes {dimension_semantics = [#tpu.dimension_semantics<arbitrary>, #tpu.dimension_semantics<arbitrary>], iteration_bounds = array<i64: 2, 1>, scalar_prefetch = 0 : i64, scratch_operands = 5 : i64, tpu.core_type = #tpu.core_type<tc>, window_params = [{transform_indices = @transform_0, window_bounds = array<i64: 8, 16>}, {pipeline_mode = #tpu.pipeline_mode<synchronous>, transform_indices = @transform_1, window_bounds = array<i64: 16, 32>}, {pipeline_mode = #tpu.pipeline_mode<synchronous>, transform_indices = @transform_2, window_bounds = array<i64: 1, 32>}, {pipeline_mode = #tpu.pipeline_mode<synchronous>, transform_indices = @transform_3, window_bounds = array<i64: 1, 32>}, {pipeline_mode = #tpu.pipeline_mode<synchronous>, transform_indices = @transform_4, window_bounds = array<i64: 32, 16>}, {pipeline_mode = #tpu.pipeline_mode<synchronous>, transform_indices = @transform_5, window_bounds = array<i64: 1, 16>}, {pipeline_mode = #tpu.pipeline_mode<synchronous>, transform_indices = @transform_6, window_bounds = array<i64: 1, 16>}, {pipeline_mode = #tpu.pipeline_mode<synchronous>, transform_indices = @transform_7, window_bounds = array<i64: 1, 1>}, {transform_indices = @transform_8, window_bounds = array<i64: 8, 1>}]} {
    %c0 = arith.constant 0 : index
    %c0_0 = arith.constant 0 : index
    %0 = vector.load %arg2[%c0, %c0_0] : memref<8x16xf32, #tpu.memory_space<vmem>>, vector<8x16xf32>
    %c0_1 = arith.constant 0 : index
    %c0_2 = arith.constant 0 : index
    %1 = vector.load %arg3[%c0_1, %c0_2] : memref<16x32xf32, #tpu.memory_space<vmem>>, vector<16x32xf32>
    %cst = arith.constant dense<0.000000e+00> : vector<8x32xf32>
    %2 = tpu.matmul %0, %1, %cst {dimension_numbers = #tpu.dot_dimension_numbers<[1], [0], [0], [1], [0, 0, 1, 1], [], []>} : vector<8x16xf32>, vector<16x32xf32>, vector<8x32xf32> -> vector<8x32xf32>
    %c0_i32 = arith.constant 0 : i32
    %3 = arith.cmpi eq, %arg0, %c0_i32 : i32
    %c0_i32_3 = arith.constant 0 : i32
    %4 = arith.cmpi eq, %arg1, %c0_i32_3 : i32
    %5 = arith.andi %3, %4 : i1
    %6 = arith.extui %5 : i1 to i32
    %c0_i32_4 = arith.constant 0 : i32
    %7 = arith.cmpi ne, %6, %c0_i32_4 : i32
    scf.if %7 {
      %cst_11 = arith.constant 0.000000e+00 : f32
      %19 = vector.broadcast %cst_11 : f32 to vector<1x32xf32>
      %c0_12 = arith.constant 0 : index
      %c0_13 = arith.constant 0 : index
      %20 = vector.load %arg11[%c0_12, %c0_13] : memref<1x32xf32, #tpu.memory_space<vmem>>, vector<1x32xf32>
      tpu.vector_store %arg11[%c0_12, %c0_13], %19 {strides = array<i32>} : memref<1x32xf32, #tpu.memory_space<vmem>>, vector<1x32xf32>,
      %cst_14 = arith.constant 0.000000e+00 : f32
      %21 = vector.broadcast %cst_14 : f32 to vector<1x32xf32>
      %c0_15 = arith.constant 0 : index
      %c0_16 = arith.constant 0 : index
      %22 = vector.load %arg12[%c0_15, %c0_16] : memref<1x32xf32, #tpu.memory_space<vmem>>, vector<1x32xf32>
      tpu.vector_store %arg12[%c0_15, %c0_16], %21 {strides = array<i32>} : memref<1x32xf32, #tpu.memory_space<vmem>>, vector<1x32xf32>,
      %cst_17 = arith.constant dense<0.000000e+00> : vector<32xf32>
      %23 = vector.multi_reduction <add>, %2, %cst_17 [0] : vector<8x32xf32> to vector<32xf32>
      %24 = vector.shape_cast %23 : vector<32xf32> to vector<1x32xf32>
      %cst_18 = arith.constant 1.250000e-01 : f32
      %25 = vector.broadcast %cst_18 : f32 to vector<1x32xf32>
      %26 = arith.mulf %24, %25 : vector<1x32xf32>
      %c0_19 = arith.constant 0 : index
      %c0_20 = arith.constant 0 : index
      %27 = vector.load %arg13[%c0_19, %c0_20] : memref<1x32xf32, #tpu.memory_space<vmem>>, vector<1x32xf32>
      tpu.vector_store %arg13[%c0_19, %c0_20], %26 {strides = array<i32>} : memref<1x32xf32, #tpu.memory_space<vmem>>, vector<1x32xf32>,
    } else {
    }
    %c0_i32_5 = arith.constant 0 : i32
    %8 = arith.cmpi eq, %arg0, %c0_i32_5 : i32
    %9 = arith.extui %8 : i1 to i32
    %c0_i32_6 = arith.constant 0 : i32
    %10 = arith.cmpi ne, %9, %c0_i32_6 : i32
    scf.if %10 {
      %c0_11 = arith.constant 0 : index
      %c0_12 = arith.constant 0 : index
      %19 = vector.load %arg13[%c0_11, %c0_12] : memref<1x32xf32, #tpu.memory_space<vmem>>, vector<1x32xf32>
      %20 = vector.broadcast %19 : vector<1x32xf32> to vector<8x32xf32>
      %21 = arith.subf %2, %20 : vector<8x32xf32>
      %c0_13 = arith.constant 0 : index
      %c0_14 = arith.constant 0 : index
      %22 = vector.load %arg11[%c0_13, %c0_14] : memref<1x32xf32, #tpu.memory_space<vmem>>, vector<1x32xf32>
      %cst_15 = arith.constant dense<0.000000e+00> : vector<32xf32>
      %23 = vector.multi_reduction <add>, %21, %cst_15 [0] : vector<8x32xf32> to vector<32xf32>
      %24 = vector.shape_cast %23 : vector<32xf32> to vector<1x32xf32>
      %25 = arith.addf %22, %24 : vector<1x32xf32>
      %c0_16 = arith.constant 0 : index
      %c0_17 = arith.constant 0 : index
      %26 = vector.load %arg11[%c0_16, %c0_17] : memref<1x32xf32, #tpu.memory_space<vmem>>, vector<1x32xf32>
      tpu.vector_store %arg11[%c0_16, %c0_17], %25 {strides = array<i32>} : memref<1x32xf32, #tpu.memory_space<vmem>>, vector<1x32xf32>,
      %c0_18 = arith.constant 0 : index
      %c0_19 = arith.constant 0 : index
      %27 = vector.load %arg12[%c0_18, %c0_19] : memref<1x32xf32, #tpu.memory_space<vmem>>, vector<1x32xf32>
      %28 = arith.mulf %21, %21 : vector<8x32xf32>
      %cst_20 = arith.constant dense<0.000000e+00> : vector<32xf32>
      %29 = vector.multi_reduction <add>, %28, %cst_20 [0] : vector<8x32xf32> to vector<32xf32>
      %30 = vector.shape_cast %29 : vector<32xf32> to vector<1x32xf32>
      %31 = arith.addf %27, %30 : vector<1x32xf32>
      %c0_21 = arith.constant 0 : index
      %c0_22 = arith.constant 0 : index
      %32 = vector.load %arg12[%c0_21, %c0_22] : memref<1x32xf32, #tpu.memory_space<vmem>>, vector<1x32xf32>
      tpu.vector_store %arg12[%c0_21, %c0_22], %31 {strides = array<i32>} : memref<1x32xf32, #tpu.memory_space<vmem>>, vector<1x32xf32>,
    } else {
    }
    %c1_i32 = arith.constant 1 : i32
    %11 = arith.cmpi eq, %arg0, %c1_i32 : i32
    %c0_i32_7 = arith.constant 0 : i32
    %12 = arith.cmpi eq, %arg1, %c0_i32_7 : i32
    %13 = arith.andi %11, %12 : i1
    %14 = arith.extui %13 : i1 to i32
    %c0_i32_8 = arith.constant 0 : i32
    %15 = arith.cmpi ne, %14, %c0_i32_8 : i32
    scf.if %15 {
      %c0_11 = arith.constant 0 : index
      %c0_12 = arith.constant 0 : index
      %19 = vector.load %arg11[%c0_11, %c0_12] : memref<1x32xf32, #tpu.memory_space<vmem>>, vector<1x32xf32>
      %cst_13 = arith.constant 1.250000e-01 : f32
      %20 = vector.broadcast %cst_13 : f32 to vector<1x32xf32>
      %21 = arith.mulf %19, %20 : vector<1x32xf32>
      %c0_14 = arith.constant 0 : index
      %c0_15 = arith.constant 0 : index
      %22 = vector.load %arg12[%c0_14, %c0_15] : memref<1x32xf32, #tpu.memory_space<vmem>>, vector<1x32xf32>
      %cst_16 = arith.constant 1.250000e-01 : f32
      %23 = vector.broadcast %cst_16 : f32 to vector<1x32xf32>
      %24 = arith.mulf %22, %23 : vector<1x32xf32>
      %25 = arith.mulf %21, %21 : vector<1x32xf32>
      %26 = arith.subf %24, %25 : vector<1x32xf32>
      %cst_17 = arith.constant 0.000000e+00 : f32
      %27 = vector.broadcast %cst_17 : f32 to vector<1x32xf32>
      %28 = arith.maximumf %26, %27 : vector<1x32xf32>
      %c0_18 = arith.constant 0 : index
      %c0_19 = arith.constant 0 : index
      %29 = vector.load %arg4[%c0_18, %c0_19] : memref<1x32xf32, #tpu.memory_space<vmem>>, vector<1x32xf32>
      %cst_20 = arith.constant 9.99999974E-6 : f32
      %30 = vector.broadcast %cst_20 : f32 to vector<1x32xf32>
      %31 = arith.addf %28, %30 : vector<1x32xf32>
      %32 = math.rsqrt %31 : vector<1x32xf32>
      %33 = arith.mulf %29, %32 : vector<1x32xf32>
      %c0_21 = arith.constant 0 : index
      %c0_22 = arith.constant 0 : index
      %34 = vector.load %arg14[%c0_21, %c0_22] : memref<1x32xf32, #tpu.memory_space<vmem>>, vector<1x32xf32>
      tpu.vector_store %arg14[%c0_21, %c0_22], %33 {strides = array<i32>} : memref<1x32xf32, #tpu.memory_space<vmem>>, vector<1x32xf32>,
      %c0_23 = arith.constant 0 : index
      %c0_24 = arith.constant 0 : index
      %35 = vector.load %arg5[%c0_23, %c0_24] : memref<1x32xf32, #tpu.memory_space<vmem>>, vector<1x32xf32>
      %c0_25 = arith.constant 0 : index
      %c0_26 = arith.constant 0 : index
      %36 = vector.load %arg13[%c0_25, %c0_26] : memref<1x32xf32, #tpu.memory_space<vmem>>, vector<1x32xf32>
      %37 = arith.addf %21, %36 : vector<1x32xf32>
      %38 = arith.mulf %37, %33 : vector<1x32xf32>
      %39 = arith.subf %35, %38 : vector<1x32xf32>
      %c0_27 = arith.constant 0 : index
      %c0_28 = arith.constant 0 : index
      %40 = vector.load %arg15[%c0_27, %c0_28] : memref<1x32xf32, #tpu.memory_space<vmem>>, vector<1x32xf32>
      tpu.vector_store %arg15[%c0_27, %c0_28], %39 {strides = array<i32>} : memref<1x32xf32, #tpu.memory_space<vmem>>, vector<1x32xf32>,
    } else {
    }
    %c1_i32_9 = arith.constant 1 : i32
    %16 = arith.cmpi eq, %arg0, %c1_i32_9 : i32
    %17 = arith.extui %16 : i1 to i32
    %c0_i32_10 = arith.constant 0 : i32
    %18 = arith.cmpi ne, %17, %c0_i32_10 : i32
    scf.if %18 {
      %c0_11 = arith.constant 0 : index
      %c0_12 = arith.constant 0 : index
      %19 = vector.load %arg14[%c0_11, %c0_12] : memref<1x32xf32, #tpu.memory_space<vmem>>, vector<1x32xf32>
      %20 = vector.broadcast %19 : vector<1x32xf32> to vector<8x32xf32>
      %21 = arith.mulf %2, %20 : vector<8x32xf32>
      %c0_13 = arith.constant 0 : index
      %c0_14 = arith.constant 0 : index
      %22 = vector.load %arg15[%c0_13, %c0_14] : memref<1x32xf32, #tpu.memory_space<vmem>>, vector<1x32xf32>
      %23 = vector.broadcast %22 : vector<1x32xf32> to vector<8x32xf32>
      %24 = arith.addf %21, %23 : vector<8x32xf32>
      %cst_15 = arith.constant 0.000000e+00 : f32
      %25 = vector.broadcast %cst_15 : f32 to vector<8x32xf32>
      %26 = arith.maximumf %24, %25 : vector<8x32xf32>
      %c0_16 = arith.constant 0 : index
      %c0_17 = arith.constant 0 : index
      %27 = vector.load %arg6[%c0_16, %c0_17] : memref<32x16xf32, #tpu.memory_space<vmem>>, vector<32x16xf32>
      %cst_18 = arith.constant dense<0.000000e+00> : vector<8x16xf32>
      %28 = tpu.matmul %26, %27, %cst_18 {dimension_numbers = #tpu.dot_dimension_numbers<[1], [0], [0], [1], [0, 0, 1, 1], [], []>} : vector<8x32xf32>, vector<32x16xf32>, vector<8x16xf32> -> vector<8x16xf32>
      %c0_19 = arith.constant 0 : index
      %c0_20 = arith.constant 0 : index
      %29 = vector.load %arg7[%c0_19, %c0_20] : memref<1x16xf32, #tpu.memory_space<vmem>>, vector<1x16xf32>
      %30 = vector.broadcast %29 : vector<1x16xf32> to vector<8x16xf32>
      %31 = arith.addf %28, %30 : vector<8x16xf32>
      %cst_21 = arith.constant 0.000000e+00 : f32
      %32 = vector.broadcast %cst_21 : f32 to vector<8x16xf32>
      %33 = arith.maximumf %31, %32 : vector<8x16xf32>
      %c0_22 = arith.constant 0 : index
      %c0_23 = arith.constant 0 : index
      %34 = vector.load %arg8[%c0_22, %c0_23] : memref<1x16xf32, #tpu.memory_space<vmem>>, vector<1x16xf32>
      %35 = vector.broadcast %34 : vector<1x16xf32> to vector<8x16xf32>
      %36 = arith.mulf %33, %35 : vector<8x16xf32>
      %cst_24 = arith.constant dense<0.000000e+00> : vector<8xf32>
      %37 = vector.multi_reduction <add>, %36, %cst_24 [1] : vector<8x16xf32> to vector<8xf32>
      %38 = vector.shape_cast %37 : vector<8xf32> to vector<8x1xf32>
      %c0_25 = arith.constant 0 : index
      %c0_26 = arith.constant 0 : index
      %39 = vector.load %arg9[%c0_25, %c0_26] : memref<1x1xf32, #tpu.memory_space<vmem>>, vector<1x1xf32>
      %40 = vector.broadcast %39 : vector<1x1xf32> to vector<8x1xf32>
      %41 = arith.addf %38, %40 : vector<8x1xf32>
      %c0_27 = arith.constant 0 : index
      %c0_28 = arith.constant 0 : index
      %42 = vector.load %arg10[%c0_27, %c0_28] : memref<8x1xf32, #tpu.memory_space<vmem>>, vector<8x1xf32>
      tpu.vector_store %arg10[%c0_27, %c0_28], %41 {strides = array<i32>} : memref<8x1xf32, #tpu.memory_space<vmem>>, vector<8x1xf32>,
    } else {
    }
    return
  }
  func.func @transform_0(%arg0: i32, %arg1: i32) -> (i32, i32) {
    %c0_i32 = arith.constant 0 : i32
    %c0_i32_0 = arith.constant 0 : i32
    return %arg1, %c0_i32 : i32, i32
  }
  func.func @transform_1(%arg0: i32, %arg1: i32) -> (i32, i32) {
    %c0_i32 = arith.constant 0 : i32
    %c0_i32_0 = arith.constant 0 : i32
    %c0_i32_1 = arith.constant 0 : i32
    return %c0_i32, %c0_i32_0 : i32, i32
  }
  func.func @transform_2(%arg0: i32, %arg1: i32) -> (i32, i32) {
    %c0_i32 = arith.constant 0 : i32
    %c0_i32_0 = arith.constant 0 : i32
    %c0_i32_1 = arith.constant 0 : i32
    return %c0_i32, %c0_i32_0 : i32, i32
  }
  func.func @transform_3(%arg0: i32, %arg1: i32) -> (i32, i32) {
    %c0_i32 = arith.constant 0 : i32
    %c0_i32_0 = arith.constant 0 : i32
    %c0_i32_1 = arith.constant 0 : i32
    return %c0_i32, %c0_i32_0 : i32, i32
  }
  func.func @transform_4(%arg0: i32, %arg1: i32) -> (i32, i32) {
    %c0_i32 = arith.constant 0 : i32
    %c0_i32_0 = arith.constant 0 : i32
    %c0_i32_1 = arith.constant 0 : i32
    return %c0_i32, %c0_i32_0 : i32, i32
  }
  func.func @transform_5(%arg0: i32, %arg1: i32) -> (i32, i32) {
    %c0_i32 = arith.constant 0 : i32
    %c0_i32_0 = arith.constant 0 : i32
    %c0_i32_1 = arith.constant 0 : i32
    return %c0_i32, %c0_i32_0 : i32, i32
  }
  func.func @transform_6(%arg0: i32, %arg1: i32) -> (i32, i32) {
    %c0_i32 = arith.constant 0 : i32
    %c0_i32_0 = arith.constant 0 : i32
    %c0_i32_1 = arith.constant 0 : i32
    return %c0_i32, %c0_i32_0 : i32, i32
  }
  func.func @transform_7(%arg0: i32, %arg1: i32) -> (i32, i32) {
    %c0_i32 = arith.constant 0 : i32
    %c0_i32_0 = arith.constant 0 : i32
    %c0_i32_1 = arith.constant 0 : i32
    return %c0_i32, %c0_i32_0 : i32, i32
  }
  func.func @transform_8(%arg0: i32, %arg1: i32) -> (i32, i32) {
    %0 = arith.muli %arg1, %arg0 : i32
    %c0_i32 = arith.constant 0 : i32
    %c0_i32_0 = arith.constant 0 : i32
    return %0, %c0_i32 : i32, i32
  }
}

</mosaic_0001>

<llo_original>
// kernel: tpu_custom_call.1
$region0: #{tpu_custom_call.1}
  #allocation0 [shape = 'u32[]', space=smem, size = 0x4, offset = 0x4, fixed_abs, tag = 'smem constant byte address 0x4 - core index']
  #allocation1 [shape = 'u32[144,128]{1,0:T(1,128)}', space=vmem, size = 0x12000, scoped, tag = 'internal scratch']
  #allocation2 [shape = 'f32[1,32]{1,0:T(1,128)}', space=vmem, size = 0x200, scoped, tag = 'scratch operand']
  #allocation3 [shape = 'f32[1,32]{1,0:T(1,128)}', space=vmem, size = 0x200, scoped, tag = 'scratch operand']
  #allocation4 [shape = 'f32[1,32]{1,0:T(1,128)}', space=vmem, size = 0x200, scoped, tag = 'scratch operand']
  #allocation5 [shape = 'f32[1,32]{1,0:T(1,128)}', space=vmem, size = 0x200, scoped, tag = 'scratch operand']
  #allocation6 [shape = 'f32[1,32]{1,0:T(1,128)}', space=vmem, size = 0x200, scoped, tag = 'scratch operand']
  #allocation7 [shape = 'f32[1,1]{1,0:T(1,128)S(1)}', space=vmem, size = 0x200, scoped, tag = 'scoped memory for tpu_custom_call.1']
  %s0 = inlined_call_operand.vmem [shape: f32[8,16], index: 0, kind: input, shape index: {}]
  %s1 = inlined_call_operand.vmem [shape: f32[16,32], index: 1, kind: input, shape index: {}]
  %s2 = inlined_call_operand.vmem [shape: f32[1,32], index: 2, kind: input, shape index: {}]
  %s3 = inlined_call_operand.vmem [shape: f32[1,32], index: 3, kind: input, shape index: {}]
  %s4 = inlined_call_operand.vmem [shape: f32[32,16], index: 4, kind: input, shape index: {}]
  %s5 = inlined_call_operand.vmem [shape: f32[1,16], index: 5, kind: input, shape index: {}]
  %s6 = inlined_call_operand.vmem [shape: f32[1,16], index: 6, kind: input, shape index: {}]
  %s7 = inlined_call_operand.<no memory space> [shape: f32[1,1], index: 7, kind: input, shape index: {}]
  %s8 = inlined_call_operand.vmem [shape: f32[8,1], index: 8, kind: output, shape index: {}]
  %s9 = sld [smem:[#allocation0]]
  $region81: #{tpu_custom_call.1} parent=0
    _
  %s11 = ssub.s32 1, %s9
  %s12 = scalar_select 0, %s11, %s9
  %v13 = vstv %s7
  %14 = vst [vmem:[#allocation7] sm:$0x1] %v13
  loop: start=0, step=1, limit=4
  $region2: #{tpu_custom_call.1} parent=0 // loop_pre_header
    _
  $region3: #{tpu_custom_call.1} parent=0 // loop_header
    %s16 = sphi 0, %s20
    %p17 = scmp.ge.s32.totalorder %s16, 4
    %s23 = sphi 0, %s35
    %s24 = sphi 0, %s31
    %s25 = sphi 0, %s23
    %s26 = sphi 0, %s24
    %s27 = sphi 0, %s25
    %s28 = sphi 0, %s26
    %s38 = sphi 0, %s40
    %s41 = sphi 0, %s38
    %s42 = sphi 0, %s41
    %s58 = sphi 0, %s42
    %s62 = sphi 0, %s62
    %s64 = sphi 0, %s62
    %s65 = sphi 0, %s64
    %s79 = sphi 0, %s65
    %s83 = sphi 0, %s83
    %s85 = sphi 0, %s83
    %s86 = sphi 0, %s85
    %s100 = sphi 0, %s86
    %s104 = sphi 0, %s104
    %s106 = sphi 0, %s104
    %s107 = sphi 0, %s106
    %s121 = sphi 0, %s107
    %s125 = sphi 0, %s125
    %s127 = sphi 0, %s125
    %s128 = sphi 0, %s127
    %s142 = sphi 0, %s128
    %s146 = sphi 0, %s146
    %s148 = sphi 0, %s146
    %s149 = sphi 0, %s148
    %s163 = sphi 0, %s149
    %s167 = sphi 0, %s167
    %s169 = sphi 0, %s167
    %s170 = sphi 0, %s169
    %s184 = sphi 0, %s170
    %s188 = sphi 0, %s188
    %s190 = sphi 0, %s188
    %s191 = sphi 0, %s190
    %s205 = sphi 0, %s191
    %s213 = sphi 0, %s215
    %s216 = sphi 0, %s213
    %s217 = sphi 0, %s216
    %s233 = sphi 0, %s217
  $region4: #{tpu_custom_call.1} parent=0 // loop_header_branch
    %19 = sbr.rel (%p17) target = $region8
  $region5: #{tpu_custom_call.1} parent=0 // loop_body
    %s21 = ssub.s32 %s16, 1
    %s22 = ssub.s32 %s16, 2
    %s29 = sadd.s32 1, %s24
    %p30 = scmp.ge.s32.totalorder %s29, 1
    %s31 = scalar_select %p30, 0, %s29
    %s32 = sadd.s32 1, %s23
    %s33 = scalar_select %p30, %s32, %s23
    %p34 = scmp.ge.s32.totalorder %s33, 2
    %s35 = scalar_select %p34, 0, %s33
    %s36 = ssub.s32 %s24, %s31
    %p37 = scmp.eq.s32.totalorder %s36, 0
    %s39 = sadd.s32 %s38, 1
    %s40 = scalar_select %p37, %s38, %s39
    %p43 = pneg %p37
    %p44 = scmp.eq.s32.totalorder %s16, 1
    %p45 = por %p43, %p44
    %p46 = scmp.ne.s32.totalorder %s38, %s41
    %p47 = scmp.eq.s32.totalorder %s16, 0
    %p48 = por %p46, %p47
    %p49 = scmp.ne.s32.totalorder %s38, %s41
    %p50 = scmp.eq.s32.totalorder %s21, 1
    %p51 = por %p49, %p50
    %p52 = scmp.ne.s32.totalorder %s41, %s42
    %p53 = scmp.eq.s32.totalorder %s21, 0
    %p54 = por %p52, %p53
    %p55 = scmp.ne.s32.totalorder %s41, %s42
    %p56 = scmp.eq.s32.totalorder %s22, 1
    %p57 = por %p55, %p56
    %p59 = scmp.ne.s32.totalorder %s42, %s58
    %p60 = scmp.eq.s32.totalorder %s22, 0
    %p61 = por %p59, %p60
    %s63 = sadd.s32 %s62, 1
    %p66 = scmp.eq.s32.totalorder %s16, 1
    %p67 = scmp.ne.s32.totalorder %s62, %s64
    %p68 = scmp.eq.s32.totalorder %s16, 0
    %p69 = por %p67, %p68
    %p70 = scmp.ne.s32.totalorder %s62, %s64
    %p71 = scmp.eq.s32.totalorder %s21, 1
    %p72 = por %p70, %p71
    %p73 = scmp.ne.s32.totalorder %s64, %s65
    %p74 = scmp.eq.s32.totalorder %s21, 0
    %p75 = por %p73, %p74
    %p76 = scmp.ne.s32.totalorder %s64, %s65
    %p77 = scmp.eq.s32.totalorder %s22, 1
    %p78 = por %p76, %p77
    %p80 = scmp.ne.s32.totalorder %s65, %s79
    %p81 = scmp.eq.s32.totalorder %s22, 0
    %p82 = por %p80, %p81
    %s84 = sadd.s32 %s83, 1
    %p87 = scmp.eq.s32.totalorder %s16, 1
    %p88 = scmp.ne.s32.totalorder %s83, %s85
    %p89 = scmp.eq.s32.totalorder %s16, 0
    %p90 = por %p88, %p89
    %p91 = scmp.ne.s32.totalorder %s83, %s85
    %p92 = scmp.eq.s32.totalorder %s21, 1
    %p93 = por %p91, %p92
    %p94 = scmp.ne.s32.totalorder %s85, %s86
    %p95 = scmp.eq.s32.totalorder %s21, 0
    %p96 = por %p94, %p95
    %p97 = scmp.ne.s32.totalorder %s85, %s86
    %p98 = scmp.eq.s32.totalorder %s22, 1
    %p99 = por %p97, %p98
    %p101 = scmp.ne.s32.totalorder %s86, %s100
    %p102 = scmp.eq.s32.totalorder %s22, 0
    %p103 = por %p101, %p102
    %s105 = sadd.s32 %s104, 1
    %p108 = scmp.eq.s32.totalorder %s16, 1
    %p109 = scmp.ne.s32.totalorder %s104, %s106
    %p110 = scmp.eq.s32.totalorder %s16, 0
    %p111 = por %p109, %p110
    %p112 = scmp.ne.s32.totalorder %s104, %s106
    %p113 = scmp.eq.s32.totalorder %s21, 1
    %p114 = por %p112, %p113
    %p115 = scmp.ne.s32.totalorder %s106, %s107
    %p116 = scmp.eq.s32.totalorder %s21, 0
    %p117 = por %p115, %p116
    %p118 = scmp.ne.s32.totalorder %s106, %s107
    %p119 = scmp.eq.s32.totalorder %s22, 1
    %p120 = por %p118, %p119
    %p122 = scmp.ne.s32.totalorder %s107, %s121
    %p123 = scmp.eq.s32.totalorder %s22, 0
    %p124 = por %p122, %p123
    %s126 = sadd.s32 %s125, 1
    %p129 = scmp.eq.s32.totalorder %s16, 1
    %p130 = scmp.ne.s32.totalorder %s125, %s127
    %p131 = scmp.eq.s32.totalorder %s16, 0
    %p132 = por %p130, %p131
    %p133 = scmp.ne.s32.totalorder %s125, %s127
    %p134 = scmp.eq.s32.totalorder %s21, 1
    %p135 = por %p133, %p134
    %p136 = scmp.ne.s32.totalorder %s127, %s128
    %p137 = scmp.eq.s32.totalorder %s21, 0
    %p138 = por %p136, %p137
    %p139 = scmp.ne.s32.totalorder %s127, %s128
    %p140 = scmp.eq.s32.totalorder %s22, 1
    %p141 = por %p139, %p140
    %p143 = scmp.ne.s32.totalorder %s128, %s142
    %p144 = scmp.eq.s32.totalorder %s22, 0
    %p145 = por %p143, %p144
    %s147 = sadd.s32 %s146, 1
    %p150 = scmp.eq.s32.totalorder %s16, 1
    %p151 = scmp.ne.s32.totalorder %s146, %s148
    %p152 = scmp.eq.s32.totalorder %s16, 0
    %p153 = por %p151, %p152
    %p154 = scmp.ne.s32.totalorder %s146, %s148
    %p155 = scmp.eq.s32.totalorder %s21, 1
    %p156 = por %p154, %p155
    %p157 = scmp.ne.s32.totalorder %s148, %s149
    %p158 = scmp.eq.s32.totalorder %s21, 0
    %p159 = por %p157, %p158
    %p160 = scmp.ne.s32.totalorder %s148, %s149
    %p161 = scmp.eq.s32.totalorder %s22, 1
    %p162 = por %p160, %p161
    %p164 = scmp.ne.s32.totalorder %s149, %s163
    %p165 = scmp.eq.s32.totalorder %s22, 0
    %p166 = por %p164, %p165
    %s168 = sadd.s32 %s167, 1
    %p171 = scmp.eq.s32.totalorder %s16, 1
    %p172 = scmp.ne.s32.totalorder %s167, %s169
    %p173 = scmp.eq.s32.totalorder %s16, 0
    %p174 = por %p172, %p173
    %p175 = scmp.ne.s32.totalorder %s167, %s169
    %p176 = scmp.eq.s32.totalorder %s21, 1
    %p177 = por %p175, %p176
    %p178 = scmp.ne.s32.totalorder %s169, %s170
    %p179 = scmp.eq.s32.totalorder %s21, 0
    %p180 = por %p178, %p179
    %p181 = scmp.ne.s32.totalorder %s169, %s170
    %p182 = scmp.eq.s32.totalorder %s22, 1
    %p183 = por %p181, %p182
    %p185 = scmp.ne.s32.totalorder %s170, %s184
    %p186 = scmp.eq.s32.totalorder %s22, 0
    %p187 = por %p185, %p186
    %s189 = sadd.s32 %s188, 1
    %p192 = scmp.eq.s32.totalorder %s16, 1
    %p193 = scmp.ne.s32.totalorder %s188, %s190
    %p194 = scmp.eq.s32.totalorder %s16, 0
    %p195 = por %p193, %p194
    %p196 = scmp.ne.s32.totalorder %s188, %s190
    %p197 = scmp.eq.s32.totalorder %s21, 1
    %p198 = por %p196, %p197
    %p199 = scmp.ne.s32.totalorder %s190, %s191
    %p200 = scmp.eq.s32.totalorder %s21, 0
    %p201 = por %p199, %p200
    %p202 = scmp.ne.s32.totalorder %s190, %s191
    %p203 = scmp.eq.s32.totalorder %s22, 1
    %p204 = por %p202, %p203
    %p206 = scmp.ne.s32.totalorder %s191, %s205
    %p207 = scmp.eq.s32.totalorder %s22, 0
    %p208 = por %p206, %p207
    %s209 = smul.u32 %s24, %s23
    %s210 = smul.u32 %s31, %s35
    %s211 = ssub.s32 %s209, %s210
    %p212 = scmp.eq.s32.totalorder %s211, 0
    %s214 = sadd.s32 %s213, 1
    %s215 = scalar_select %p212, %s213, %s214
    %p218 = pneg %p212
    %p219 = scmp.eq.s32.totalorder %s16, 1
    %p220 = por %p218, %p219
    %p221 = scmp.ne.s32.totalorder %s213, %s216
    %p222 = scmp.eq.s32.totalorder %s16, 0
    %p223 = por %p221, %p222
    %p224 = scmp.ne.s32.totalorder %s213, %s216
    %p225 = scmp.eq.s32.totalorder %s21, 1
    %p226 = por %p224, %p225
    %p227 = scmp.ne.s32.totalorder %s216, %s217
    %p228 = scmp.eq.s32.totalorder %s21, 0
    %p229 = por %p227, %p228
    %p230 = scmp.ne.s32.totalorder %s216, %s217
    %p231 = scmp.eq.s32.totalorder %s22, 1
    %p232 = por %p230, %p231
    %p234 = scmp.ne.s32.totalorder %s217, %s233
    %p235 = scmp.eq.s32.totalorder %s22, 0
    %p236 = por %p234, %p235
    %p237 = scmp.le.s32.totalorder 1, %s16
    %p238 = scmp.lt.s32.totalorder %s16, 3
    %p239 = pnand %p237, %p238
    %p240 = pneg %p239
    // Predicated region
    $region9: #{tpu_custom_call.1} parent=5 // pred_check
      _
    $region10: #{tpu_custom_call.1} parent=5 // pred_check_branch
      %242 = sbr.rel (%p239) target = $region12
    $region11: #{tpu_custom_call.1} parent=5 // pred_region
      %s243 = ssub.s32 %s16, 1
      // Predicated region
      $region13: #{tpu_custom_call.1} parent=11 // pred_check
        %p244 = pneg %p54
      $region14: #{tpu_custom_call.1} parent=11 // pred_check_branch
        %246 = sbr.rel (%p244) target = $region16
      $region15: #{tpu_custom_call.1} parent=11 // pred_region
        %p247 = scmp.lt.s32.totalorder %s26, 0
        %s248 = scalar_select %p247, %s26, 0
        %s249 = smul.addr %s248, 8
        %s250 = scalar_lea.vmem %s0, %s249
      $region16: #{tpu_custom_call.1} parent=11 // pred_fallthru
        _
      // Predicated region
      $region17: #{tpu_custom_call.1} parent=11 // pred_check
        %p251 = pneg %p75
      $region18: #{tpu_custom_call.1} parent=11 // pred_check_branch
        %253 = sbr.rel (%p251) target = $region20
      $region19: #{tpu_custom_call.1} parent=11 // pred_region
        _
      $region20: #{tpu_custom_call.1} parent=11 // pred_fallthru
        _
      // Predicated region
      $region21: #{tpu_custom_call.1} parent=11 // pred_check
        %p254 = pneg %p96
      $region22: #{tpu_custom_call.1} parent=11 // pred_check_branch
        %256 = sbr.rel (%p254) target = $region24
      $region23: #{tpu_custom_call.1} parent=11 // pred_region
        _
      $region24: #{tpu_custom_call.1} parent=11 // pred_fallthru
        _
      // Predicated region
      $region25: #{tpu_custom_call.1} parent=11 // pred_check
        %p257 = pneg %p117
      $region26: #{tpu_custom_call.1} parent=11 // pred_check_branch
        %259 = sbr.rel (%p257) target = $region28
      $region27: #{tpu_custom_call.1} parent=11 // pred_region
        _
      $region28: #{tpu_custom_call.1} parent=11 // pred_fallthru
        _
      // Predicated region
      $region29: #{tpu_custom_call.1} parent=11 // pred_check
        %p260 = pneg %p138
      $region30: #{tpu_custom_call.1} parent=11 // pred_check_branch
        %262 = sbr.rel (%p260) target = $region32
      $region31: #{tpu_custom_call.1} parent=11 // pred_region
        _
      $region32: #{tpu_custom_call.1} parent=11 // pred_fallthru
        _
      // Predicated region
      $region33: #{tpu_custom_call.1} parent=11 // pred_check
        %p263 = pneg %p159
      $region34: #{tpu_custom_call.1} parent=11 // pred_check_branch
        %265 = sbr.rel (%p263) target = $region36
      $region35: #{tpu_custom_call.1} parent=11 // pred_region
        _
      $region36: #{tpu_custom_call.1} parent=11 // pred_fallthru
        _
      // Predicated region
      $region37: #{tpu_custom_call.1} parent=11 // pred_check
        %p266 = pneg %p180
      $region38: #{tpu_custom_call.1} parent=11 // pred_check_branch
        %268 = sbr.rel (%p266) target = $region40
      $region39: #{tpu_custom_call.1} parent=11 // pred_region
        _
      $region40: #{tpu_custom_call.1} parent=11 // pred_fallthru
        _
      // Predicated region
      $region41: #{tpu_custom_call.1} parent=11 // pred_check
        %p269 = pneg %p201
      $region42: #{tpu_custom_call.1} parent=11 // pred_check_branch
        %271 = sbr.rel (%p269) target = $region44
      $region43: #{tpu_custom_call.1} parent=11 // pred_region
        _
      $region44: #{tpu_custom_call.1} parent=11 // pred_fallthru
        _
    $region12: #{tpu_custom_call.1} parent=5 // pred_fallthru
      _
    %p272 = scmp.lt.s32.totalorder %s16, 2
    // Predicated region
    $region45: #{tpu_custom_call.1} parent=5 // pred_check
      %p273 = pneg %p272
    $region46: #{tpu_custom_call.1} parent=5 // pred_check_branch
      %275 = sbr.rel (%p273) target = $region48
    $region47: #{tpu_custom_call.1} parent=5 // pred_region
      _
    $region48: #{tpu_custom_call.1} parent=5 // pred_fallthru
      _
    %p276 = scmp.le.s32.totalorder 1, %s16
    %p277 = scmp.lt.s32.totalorder %s16, 3
    %p278 = pnand %p276, %p277
    %p279 = pneg %p278
    // Predicated region
    $region49: #{tpu_custom_call.1} parent=5 // pred_check
      _
    $region50: #{tpu_custom_call.1} parent=5 // pred_check_branch
      %281 = sbr.rel (%p278) target = $region52
    $region51: #{tpu_custom_call.1} parent=5 // pred_region
      %s282 = ssub.s32 %s16, 1
      %p283 = scmp.lt.s32.totalorder %s26, 0
      %s284 = scalar_select %p283, %s26, 0
      %s285 = smul.addr %s284, 8
      %s286 = scalar_lea.vmem %s0, %s285
      %p287 = pneg %p54
      %p288 = pneg %p51
      %p289 = pneg %p75
      %p290 = pneg %p72
      %p291 = pneg %p96
      %p292 = pneg %p93
      %p293 = pneg %p117
      %p294 = pneg %p114
      %p295 = pneg %p138
      %p296 = pneg %p135
      %p297 = pneg %p159
      %p298 = pneg %p156
      %p299 = pneg %p180
      %p300 = pneg %p177
      %p301 = pneg %p201
      %p302 = pneg %p198
      %p303 = pneg %p229
      %p304 = pneg %p226
      %s305 = smul.u32 %s26, %s25
      %p306 = scmp.lt.s32.totalorder %s305, 0
      %s307 = scalar_select %p306, %s305, 0
      %s308 = smul.addr %s307, 8
      %s309 = scalar_lea.vmem %s8, %s308
      %p310 = scmp.lt.s32.totalorder %s26, 0
      %s311 = scalar_select %p310, %s26, 0
      %s312 = smul.addr %s311, 8
      %s313 = scalar_lea.vmem %s0, %s312
      %s314 = smul.u32 %s26, %s25
      %p315 = scmp.lt.s32.totalorder %s314, 0
      %s316 = scalar_select %p315, %s314, 0
      %s317 = smul.addr %s316, 8
      %s318 = scalar_lea.vmem %s8, %s317
      %s319 = smul.u32 %s26, %s25
      %v320 = vld [vmem:[%s313] sm:$0xff]
      %v321 = vld [vmem:[%s1] sm:$0xff]
      %v322 = vld [vmem:[%s1 + $0x8] sm:$0xff]
      %vm323 = vcmask 130048
      %v325 = vsel %vm323, %v320, 0
      %327 = vmatprep.subr.mxu0 0.0
      %328 = vmatpush1.msra.mxu0 0.0
      %329 = vmatprep.subr.mxu0 0.0
      %330 = vmatpush1.msra.mxu0 0.0
      %331 = vmatprep.subr.mxu0 0.0
      %332 = vmatpush1.msra.mxu0 0.0
      %333 = vmatprep.subr.mxu0 0.0
      %334 = vmatpush1.msra.mxu0 0.0
      %335 = vmatprep.subr.mxu0 0.0
      %336 = vmatpush1.msra.mxu0 0.0
      %337 = vmatprep.subr.mxu0 0.0
      %338 = vmatpush1.msra.mxu0 0.0
      %339 = vmatprep.subr.mxu0 0.0
      %340 = vmatpush1.msra.mxu0 0.0
      %341 = vmatprep.subr.mxu0 0.0
      %342 = vmatpush1.msra.mxu0 0.0
      %343 = vmatprep.subr.mxu0 0.0
      %344 = vmatpush1.msra.mxu0 0.0
      %345 = vmatprep.subr.mxu0 0.0
      %346 = vmatpush1.msra.mxu0 0.0
      %347 = vmatprep.subr.mxu0 0.0
      %348 = vmatpush1.msra.mxu0 0.0
      %349 = vmatprep.subr.mxu0 0.0
      %350 = vmatpush1.msra.mxu0 0.0
      %351 = vmatprep.subr.mxu0 0.0
      %352 = vmatpush1.msra.mxu0 0.0
      %353 = vmatprep.subr.mxu0 0.0
      %354 = vmatpush1.msra.mxu0 0.0
      %355 = vmatprep.subr.mxu0 0.0
      %356 = vmatpush1.msra.mxu0 %v322
      %357 = vmatprep.subr.mxu0 0.0
      %358 = vmatpush1.msra.mxu0 %v321
      %359 = vmatprep.subr.mxu0 0.0
      %360 = vmatpush2.msra.mxu0 0.0
      %361 = vmatprep.subr.mxu0 0.0
      %362 = vmatpush2.msra.mxu0 0.0
      %363 = vmatprep.subr.mxu0 0.0
      %364 = vmatpush2.msra.mxu0 0.0
      %365 = vmatprep.subr.mxu0 0.0
      %366 = vmatpush2.msra.mxu0 0.0
      %367 = vmatprep.subr.mxu0 0.0
      %368 = vmatpush2.msra.mxu0 0.0
      %369 = vmatprep.subr.mxu0 0.0
      %370 = vmatpush2.msra.mxu0 0.0
      %371 = vmatprep.subr.mxu0 0.0
      %372 = vmatpush2.msra.mxu0 0.0
      %373 = vmatprep.subr.mxu0 0.0
      %374 = vmatpush2.msra.mxu0 0.0
      %375 = vmatprep.subr.mxu0 0.0
      %376 = vmatpush2.msra.mxu0 0.0
      %377 = vmatprep.subr.mxu0 0.0
      %378 = vmatpush2.msra.mxu0 0.0
      %379 = vmatprep.subr.mxu0 0.0
      %380 = vmatpush2.msra.mxu0 0.0
      %381 = vmatprep.subr.mxu0 0.0
      %382 = vmatpush2.msra.mxu0 0.0
      %383 = vmatprep.subr.mxu0 0.0
      %384 = vmatpush2.msra.mxu0 0.0
      %385 = vmatprep.subr.mxu0 0.0
      %386 = vmatpush2.msra.mxu0 0.0
      %387 = vmatprep.subr.mxu0 0.0
      %388 = vmatpush2.msra.mxu0 0.0
      %389 = vmatprep.subr.mxu0 0.0
      %390 = vmatpush2.msra.mxu0 0.0
      %391 = vmatprep.mubr.f32.mxu0 0.0
      %392 = vmatmul.mubr.f32.gmra.mxu0 %v325
      %v393 = vpop.f32.mrf.mxu0
      %v394 = vadd.f32 0.0, %v393
      %v395 = vpop.f32.mrf.mxu0
      %396 = vdwg.mxu0
      %p397 = scmp.eq.s32.totalorder %s25, 0
      %p398 = scmp.eq.s32.totalorder %s26, 0
      %p399 = pnand %p397, %p398
      %p400 = pneg %p399
      // Predicated region
      $region53: #{tpu_custom_call.1} parent=51 // pred_check
        _
      $region54: #{tpu_custom_call.1} parent=51 // pred_check_branch
        %402 = sbr.rel (%p399) target = $region56
      $region55: #{tpu_custom_call.1} parent=51 // pred_region
        %vm403 = vcmask 253952
        %404 = vst.msk [vmem:[#allocation2] sm:$0x1] %vm403, 0.0
        %405 = vst.msk [vmem:[#allocation3] sm:$0x1] %vm403, 0.0
        %vm406 = vcmask 261120
        %v407 = vsel %vm406, %v394, 0.0
        %v408 = vrot.slane %v407, 4
        %v409 = vadd.f32 %v407, %v408
        %v410 = vrot.slane %v409, 2
        %v411 = vadd.f32 %v409, %v410
        %v412 = vrot.slane %v411, 1
        %v413 = vadd.f32 %v411, %v412
        %v414 = vmul.f32 %v413, 0.125
        %415 = vst.msk [vmem:[#allocation4] sm:$0x1] %vm403, %v414
      $region56: #{tpu_custom_call.1} parent=51 // pred_fallthru
        _
      // Predicated region
      $region57: #{tpu_custom_call.1} parent=51 // pred_check
        %p416 = pneg %p397
      $region58: #{tpu_custom_call.1} parent=51 // pred_check_branch
        %418 = sbr.rel (%p416) target = $region60
      $region59: #{tpu_custom_call.1} parent=51 // pred_region
        %v419 = vld [vmem:[#allocation4] sm:$0x1]
        %v421 = vlaneseq
        %v422 = vshrl.u32 %v421, 7
        %v423 = vsub.s32 0, %v422
        %v424 = vrot.slane %v419, %v423
        %v426 = vsub.f32 %v394, %v424
        %v427 = vld [vmem:[#allocation2] sm:$0x1]
        %vm428 = vcmask 261120
        %v429 = vsel %vm428, %v426, 0.0
        %v430 = vrot.slane %v429, 4
        %v431 = vadd.f32 %v429, %v430
        %v432 = vrot.slane %v431, 2
        %v433 = vadd.f32 %v431, %v432
        %v434 = vrot.slane %v433, 1
        %v435 = vadd.f32 %v433, %v434
        %v436 = vadd.f32 %v427, %v435
        %vm437 = vcmask 253952
        %438 = vst.msk [vmem:[#allocation2] sm:$0x1] %vm437, %v436
        %v439 = vld [vmem:[#allocation3] sm:$0x1]
        %v440 = vmul.f32 %v426, %v426
        %v441 = vsel %vm428, %v440, 0.0
        %v442 = vrot.slane %v441, 4
        %v443 = vadd.f32 %v441, %v442
        %v444 = vrot.slane %v443, 2
        %v445 = vadd.f32 %v443, %v444
        %v446 = vrot.slane %v445, 1
        %v447 = vadd.f32 %v445, %v446
        %v448 = vadd.f32 %v439, %v447
        %449 = vst.msk [vmem:[#allocation3] sm:$0x1] %vm437, %v448
      $region60: #{tpu_custom_call.1} parent=51 // pred_fallthru
        _
      %p450 = scmp.eq.s32.totalorder %s25, 1
      %p451 = pnand %p450, %p398
      %p452 = pneg %p451
      // Predicated region
      $region61: #{tpu_custom_call.1} parent=51 // pred_check
        _
      $region62: #{tpu_custom_call.1} parent=51 // pred_check_branch
        %454 = sbr.rel (%p451) target = $region64
      $region63: #{tpu_custom_call.1} parent=51 // pred_region
        %v455 = vld [vmem:[#allocation2] sm:$0x1]
        %v456 = vmul.f32 %v455, 0.125
        %v457 = vld [vmem:[#allocation3] sm:$0x1]
        %v458 = vmul.f32 %v457, 0.125
        %v459 = vmul.f32 %v456, %v456
        %v460 = vsub.f32 %v458, %v459
        %v461 = vmax.f32 %v460, 0.0
        %v462 = vld [vmem:[%s2] sm:$0x1]
        %v463 = vadd.f32 %v461, 1e-05
        %v464 = vrsqrt.pop %v463
        %v465 = vmul.f32 %v462, %v464
        %vm466 = vcmask 253952
        %467 = vst.msk [vmem:[#allocation5] sm:$0x1] %vm466, %v465
        %v468 = vld [vmem:[%s3] sm:$0x1]
        %v469 = vld [vmem:[#allocation4] sm:$0x1]
        %v470 = vadd.f32 %v456, %v469
        %v471 = vmul.f32 %v470, %v465
        %v472 = vsub.f32 %v468, %v471
        %473 = vst.msk [vmem:[#allocation6] sm:$0x1] %vm466, %v472
      $region64: #{tpu_custom_call.1} parent=51 // pred_fallthru
        _
      // Predicated region
      $region65: #{tpu_custom_call.1} parent=51 // pred_check
        %p474 = pneg %p450
      $region66: #{tpu_custom_call.1} parent=51 // pred_check_branch
        %476 = sbr.rel (%p474) target = $region68
      $region67: #{tpu_custom_call.1} parent=51 // pred_region
        %v477 = vld [vmem:[#allocation5] sm:$0x1]
        %v479 = vlaneseq
        %v480 = vshrl.u32 %v479, 7
        %v481 = vsub.s32 0, %v480
        %v482 = vrot.slane %v477, %v481
        %v484 = vmul.f32 %v394, %v482
        %v485 = vld [vmem:[#allocation6] sm:$0x1]
        %v487 = vlaneseq
        %v488 = vshrl.u32 %v487, 7
        %v489 = vsub.s32 0, %v488
        %v490 = vrot.slane %v485, %v489
        %v492 = vadd.f32 %v484, %v490
        %v493 = vmax.f32 %v492, 0.0
        %v494 = vld [vmem:[%s4] sm:$0xff]
        %v495 = vld [vmem:[%s4 + $0x8] sm:$0xff]
        %v496 = vld [vmem:[%s4 + $0x10] sm:$0xff]
        %v497 = vld [vmem:[%s4 + $0x18] sm:$0xff]
        %v498 = vld [vmem:[%s5] sm:$0x1]
        %v500 = vlaneseq
        %v501 = vshrl.u32 %v500, 7
        %v502 = vsub.s32 0, %v501
        %v503 = vrot.slane %v498, %v502
        %vm505 = vcmask 261120
        %v507 = vsel %vm505, %v493, 0
        %509 = vmatprep.subr.mxu0 0.0
        %510 = vmatpush1.msra.mxu0 0.0
        %511 = vmatprep.subr.mxu0 0.0
        %512 = vmatpush1.msra.mxu0 0.0
        %513 = vmatprep.subr.mxu0 0.0
        %514 = vmatpush1.msra.mxu0 0.0
        %515 = vmatprep.subr.mxu0 0.0
        %516 = vmatpush1.msra.mxu0 0.0
        %517 = vmatprep.subr.mxu0 0.0
        %518 = vmatpush1.msra.mxu0 0.0
        %519 = vmatprep.subr.mxu0 0.0
        %520 = vmatpush1.msra.mxu0 0.0
        %521 = vmatprep.subr.mxu0 0.0
        %522 = vmatpush1.msra.mxu0 0.0
        %523 = vmatprep.subr.mxu0 0.0
        %524 = vmatpush1.msra.mxu0 0.0
        %525 = vmatprep.subr.mxu0 0.0
        %526 = vmatpush1.msra.mxu0 0.0
        %527 = vmatprep.subr.mxu0 0.0
        %528 = vmatpush1.msra.mxu0 0.0
        %529 = vmatprep.subr.mxu0 0.0
        %530 = vmatpush1.msra.mxu0 0.0
        %531 = vmatprep.subr.mxu0 0.0
        %532 = vmatpush1.msra.mxu0 0.0
        %533 = vmatprep.subr.mxu0 0.0
        %534 = vmatpush1.msra.mxu0 %v497
        %535 = vmatprep.subr.mxu0 0.0
        %536 = vmatpush1.msra.mxu0 %v496
        %537 = vmatprep.subr.mxu0 0.0
        %538 = vmatpush1.msra.mxu0 %v495
        %539 = vmatprep.subr.mxu0 0.0
        %540 = vmatpush1.msra.mxu0 %v494
        %541 = vmatprep.subr.mxu0 0.0
        %542 = vmatpush2.msra.mxu0 0.0
        %543 = vmatprep.subr.mxu0 0.0
        %544 = vmatpush2.msra.mxu0 0.0
        %545 = vmatprep.subr.mxu0 0.0
        %546 = vmatpush2.msra.mxu0 0.0
        %547 = vmatprep.subr.mxu0 0.0
        %548 = vmatpush2.msra.mxu0 0.0
        %549 = vmatprep.subr.mxu0 0.0
        %550 = vmatpush2.msra.mxu0 0.0
        %551 = vmatprep.subr.mxu0 0.0
        %552 = vmatpush2.msra.mxu0 0.0
        %553 = vmatprep.subr.mxu0 0.0
        %554 = vmatpush2.msra.mxu0 0.0
        %555 = vmatprep.subr.mxu0 0.0
        %556 = vmatpush2.msra.mxu0 0.0
        %557 = vmatprep.subr.mxu0 0.0
        %558 = vmatpush2.msra.mxu0 0.0
        %559 = vmatprep.subr.mxu0 0.0
        %560 = vmatpush2.msra.mxu0 0.0
        %561 = vmatprep.subr.mxu0 0.0
        %562 = vmatpush2.msra.mxu0 0.0
        %563 = vmatprep.subr.mxu0 0.0
        %564 = vmatpush2.msra.mxu0 0.0
        %565 = vmatprep.subr.mxu0 0.0
        %566 = vmatpush2.msra.mxu0 0.0
        %567 = vmatprep.subr.mxu0 0.0
        %568 = vmatpush2.msra.mxu0 0.0
        %569 = vmatprep.subr.mxu0 0.0
        %570 = vmatpush2.msra.mxu0 0.0
        %571 = vmatprep.subr.mxu0 0.0
        %572 = vmatpush2.msra.mxu0 0.0
        %573 = vmatprep.mubr.f32.mxu0 0.0
        %574 = vmatmul.mubr.f32.gmra.mxu0 %v507
        %v575 = vpop.f32.mrf.mxu0
        %v576 = vadd.f32 %v503, %v575
        %v577 = vpop.f32.mrf.mxu0
        %578 = vdwg.mxu0
        %v579 = vmax.f32 %v576, 0.0
        %v580 = vld [vmem:[%s6] sm:$0x1]
        %v582 = vlaneseq
        %v583 = vshrl.u32 %v582, 7
        %v584 = vsub.s32 0, %v583
        %v585 = vrot.slane %v580, %v584
        %v587 = vmul.f32 %v579, %v585
        %v588 = vsel %vm323, %v587, 0.0
        %589 = vadd.xlane.f32.xlu0 %v588
        %v590 = vpop.xlane.xlu0 %589
        %v591 = vld [vmem:[#allocation7] sm:$0x1]
        %v593 = vlaneseq
        %v594 = vshrl.u32 %v593, 7
        %v595 = vsub.s32 0, %v594
        %v596 = vrot.slane %v591, %v595
        %v598 = vadd.f32 %v590, %v596
        %vm599 = vcmask 7168
        %600 = vst.msk [vmem:[%s318] sm:$0xff] %vm599, %v598
      $region68: #{tpu_custom_call.1} parent=51 // pred_fallthru
        _
      %s601 = smul.u32 %s26, %s25
      %p602 = scmp.lt.s32.totalorder %s601, 0
      %s603 = scalar_select %p602, %s601, 0
      %s604 = smul.addr %s603, 8
      %s605 = scalar_lea.vmem %s8, %s604
      // Predicated region
      $region69: #{tpu_custom_call.1} parent=51 // pred_check
        %p606 = pneg %p226
      $region70: #{tpu_custom_call.1} parent=51 // pred_check_branch
        %608 = sbr.rel (%p606) target = $region72
      $region71: #{tpu_custom_call.1} parent=51 // pred_region
        %s609 = smul.u32 %s26, %s25
      $region72: #{tpu_custom_call.1} parent=51 // pred_fallthru
        _
    $region52: #{tpu_custom_call.1} parent=5 // pred_fallthru
      _
    %p610 = scmp.le.s32.totalorder 2, %s16
    // Predicated region
    $region73: #{tpu_custom_call.1} parent=5 // pred_check
      %p611 = pneg %p610
    $region74: #{tpu_custom_call.1} parent=5 // pred_check_branch
      %613 = sbr.rel (%p611) target = $region76
    $region75: #{tpu_custom_call.1} parent=5 // pred_region
      %s614 = ssub.s32 %s16, 2
      // Predicated region
      $region77: #{tpu_custom_call.1} parent=75 // pred_check
        %p615 = pneg %p232
      $region78: #{tpu_custom_call.1} parent=75 // pred_check_branch
        %617 = sbr.rel (%p615) target = $region80
      $region79: #{tpu_custom_call.1} parent=75 // pred_region
        %s618 = smul.u32 %s28, %s27
        %p619 = scmp.lt.s32.totalorder %s618, 0
        %s620 = scalar_select %p619, %s618, 0
        %s621 = smul.addr %s620, 8
        %s622 = scalar_lea.vmem %s8, %s621
      $region80: #{tpu_custom_call.1} parent=75 // pred_fallthru
        _
    $region76: #{tpu_custom_call.1} parent=5 // pred_fallthru
      _
  $region6: #{tpu_custom_call.1} parent=0 // loop_footer
    %s20 = sadd.s32 1, %s16
  $region7: #{tpu_custom_call.1} parent=0 // loop_footer_branch
    %15 = sbr.rel target = $region3
  $region8: #{tpu_custom_call.1} parent=0 // loop_exit
    _

</llo_original>
